<compile_context>
chip_gen: v7x
topology: tpu7x:2x2x1
jax: 0.10.0
libtpu: 0.0.40
codegen_flags: <defaults>
</compile_context>

<pallas_src>
import functools
import math

import jax
import jax.numpy as jnp
from jax import lax
from jax.experimental import pallas as pl
from jax.experimental.pallas import tpu as pltpu


def _qkv_attn_kernel(*refs, scale2, matmul_dtype, has_encoder):
    # Blocks (channels-first, lane axis = sequence position):
    #   q_ref:  (1, hb, C, tq)     k_ref/v_ref:   (1, hb, C, T)
    #   ek_ref/ev_ref (optional):  (1, hb, C, S_enc)
    #   o_ref:  (1, hb, C, tq)
    if has_encoder:
        q_ref, k_ref, v_ref, ek_ref, ev_ref, o_ref = refs
    else:
        q_ref, k_ref, v_ref, o_ref = refs

    # Fold both 1/ch**0.25 scales into q only (scale2 = 1/sqrt(ch)), scale in
    # the input dtype, then cast operands to the MXU-friendly dtype (bf16 for
    # f32 inputs).  Accumulation stays f32 via preferred_element_type.
    q = (q_ref[0] * scale2).astype(matmul_dtype)   # (hb, C, tq)
    k = k_ref[0].astype(matmul_dtype)              # (hb, C, T)
    v = v_ref[0].astype(matmul_dtype)              # (hb, C, T)

    dn_qk = (((1,), (1,)), ((0,), (0,)))           # contract C, batch over heads
    dn_pv = (((2,), (2,)), ((0,), (0,)))           # contract S, batch over heads

    # scores[h, t, s] = sum_c q[h, c, t] * k[h, c, s]  (no transposes needed)
    s_self = lax.dot_general(q, k, dn_qk, preferred_element_type=jnp.float32)

    if has_encoder:
        ek = ek_ref[0].astype(matmul_dtype)
        ev = ev_ref[0].astype(matmul_dtype)
        s_enc = lax.dot_general(q, ek, dn_qk, preferred_element_type=jnp.float32)
        # Joint (exact) softmax over [encoder_kv ; self] keys without
        # concatenating along the lane axis.
        m = jnp.maximum(jnp.max(s_self, axis=-1, keepdims=True),
                        jnp.max(s_enc, axis=-1, keepdims=True))
        p_self = jnp.exp(s_self - m)
        p_enc = jnp.exp(s_enc - m)
        denom = jnp.sum(p_self, axis=-1) + jnp.sum(p_enc, axis=-1)   # (hb, tq)
        a = (lax.dot_general(v, p_self.astype(matmul_dtype), dn_pv,
                             preferred_element_type=jnp.float32)
             + lax.dot_general(ev, p_enc.astype(matmul_dtype), dn_pv,
                               preferred_element_type=jnp.float32))  # (hb, C, tq)
    else:
        m = jnp.max(s_self, axis=-1, keepdims=True)
        p_self = jnp.exp(s_self - m)
        denom = jnp.sum(p_self, axis=-1)                             # (hb, tq)
        a = lax.dot_general(v, p_self.astype(matmul_dtype), dn_pv,
                            preferred_element_type=jnp.float32)      # (hb, C, tq)

    # Deferred normalization on the small (hb, tq) denominator; exact
    # reciprocal is essentially free here.
    inv = pl.reciprocal(denom, approx=False)
    o_ref[0] = (a * inv[:, None, :]).astype(o_ref.dtype)


def _vmem_budget_and_limit():
    """(tiling budget, vmem_limit_bytes, physical VMEM) based on the chip."""
    phys = 64 * 1024 * 1024  # conservative fallback (v7x per-TC VMEM)
    try:
        info = pltpu.get_tpu_info()
        phys = int(getattr(info, "vmem_capacity_bytes", phys))
    except Exception:
        pass
    limit = min(phys * 3 // 4, 96 * 1024 * 1024)        # 96 MiB on v5e/v6e, 48 MiB on v7x
    budget = max(min(limit - 16 * 1024 * 1024, 64 * 1024 * 1024), 16 * 1024 * 1024)
    return budget, limit, phys


def _choose_tiles(n_heads, ch, t_len, s_total, itemsize, n_batch, budget_bytes):
    """Pick (head_block hb | n_heads, q_tile tq | t_len) fitting the VMEM budget."""
    tq = t_len
    for cand in (512, 256, 128):                        # lane-dense multiples of 128
        if t_len > cand and t_len % cand == 0:
            tq = cand
            break

    def footprint(hb, tq_):
        qo = 2 * 2 * hb * ch * tq_ * itemsize           # double-buffered q + out blocks
        kv = 2 * 2 * hb * ch * s_total * itemsize       # double-buffered K,V (self + enc)
        scores = 3 * hb * tq_ * s_total * 4             # fp32 scores/exp + bf16 copies
        return qo + kv + scores

    if footprint(1, tq) > budget_bytes and tq > 128 and t_len % 128 == 0:
        tq = 128

    # Keep >= 2 parallel grid blocks for v7x's 2 TensorCores (the batch axis
    # already provides them when n_batch >= 2).
    hb_cap = n_heads if n_batch >= 2 else max(1, n_heads // 2)
    hb = 1
    for cand in range(hb_cap, 0, -1):
        if n_heads % cand == 0 and footprint(cand, tq) <= budget_bytes:
            hb = cand
            break
    return hb, tq, footprint(hb, tq)


def qkv_attention(qkv, n_heads, encoder_kv=None):
    """Pallas implementation of QKVAttention.forward.

    qkv:        [N, 3*H*C, T]
    encoder_kv: optional [N, 2*H*C, S_enc]
    returns:    [N, H*C, T]
    """
    bs, width, length = qkv.shape
    assert width % (3 * n_heads) == 0
    ch = width // (3 * n_heads)
    has_encoder = encoder_kv is not None

    # Free dim-splitting reshape (bitcast): no HBM copy, no split/concatenate.
    qkv_r = qkv.reshape(bs, 3 * n_heads, ch, length)    # [N, 3H, C, T]
    s_enc = 0
    enc_r = None
    if has_encoder:
        assert encoder_kv.shape[1] == 2 * ch * n_heads
        s_enc = encoder_kv.shape[-1]
        enc_r = encoder_kv.reshape(bs, 2 * n_heads, ch, s_enc)   # [N, 2H, C, S_enc]
    s_total = length + s_enc

    matmul_dtype = jnp.bfloat16 if qkv.dtype == jnp.float32 else qkv.dtype

    itemsize = qkv.dtype.itemsize
    budget, vmem_limit, phys = _vmem_budget_and_limit()
    hb, tq, fp = _choose_tiles(n_heads, ch, length, s_total, itemsize, bs, budget)
    if fp + 8 * 1024 * 1024 > vmem_limit:
        # Safe fallback for shapes where even hb=1 exceeds the default budget
        # (large S / non-128-multiple T): raise the limit toward physical VMEM.
        vmem_limit = min(phys * 15 // 16, fp + 8 * 1024 * 1024)

    nhb = n_heads // hb
    grid = (bs, nhb, length // tq)                      # q-tile axis innermost

    # q / k / v are selected out of the single qkv array purely via index_map
    # offsets along the (3*H) axis: q -> [0, H), k -> [H, 2H), v -> [2H, 3H).
    in_specs = [
        pl.BlockSpec((1, hb, ch, tq), lambda n, h, t: (n, h, 0, t)),
        pl.BlockSpec((1, hb, ch, length), lambda n, h, t: (n, nhb + h, 0, 0)),
        pl.BlockSpec((1, hb, ch, length), lambda n, h, t: (n, 2 * nhb + h, 0, 0)),
    ]
    inputs = [qkv_r, qkv_r, qkv_r]
    if has_encoder:
        in_specs += [
            pl.BlockSpec((1, hb, ch, s_enc), lambda n, h, t: (n, h, 0, 0)),
            pl.BlockSpec((1, hb, ch, s_enc), lambda n, h, t: (n, nhb + h, 0, 0)),
        ]
        inputs += [enc_r, enc_r]

    scale = 1.0 / math.sqrt(math.sqrt(ch))
    kernel = functools.partial(_qkv_attn_kernel, scale2=scale * scale,
                               matmul_dtype=matmul_dtype, has_encoder=has_encoder)

    out_bytes = bs * n_heads * ch * length * itemsize
    enc_bytes = (enc_r.size * encoder_kv.dtype.itemsize) if has_encoder else 0
    cost = pl.CostEstimate(
        flops=int(4 * bs * n_heads * length * s_total * ch),      # QK^T + PV, 2 flops/MAC
        transcendentals=int(bs * n_heads * length * s_total),     # exp
        bytes_accessed=int(qkv.size * itemsize + enc_bytes + out_bytes),
    )

    out = pl.pallas_call(
        kernel,
        out_shape=jax.ShapeDtypeStruct((bs, n_heads, ch, length), qkv.dtype),
        grid_spec=pltpu.PrefetchScalarGridSpec(
            num_scalar_prefetch=0,
            grid=grid,
            in_specs=in_specs,
            out_specs=pl.BlockSpec((1, hb, ch, tq), lambda n, h, t: (n, h, 0, t)),
        ),
        compiler_params=pltpu.CompilerParams(
            # q-tile axis "arbitrary": on v7x only batch/head axes are sharded
            # across the 2 TensorCores, so K/V stay resident across q-tiles.
            dimension_semantics=("parallel", "parallel", "arbitrary"),
            vmem_limit_bytes=int(vmem_limit),
        ),
        cost_estimate=cost,
    )(*inputs)                                          # [N, H, C, T]

    # Free dim-merging reshape back to the module's output layout.
    return out.reshape(bs, n_heads * ch, length)


def _reference_qkv_attention(qkv, n_heads, encoder_kv=None, matmul_dtype=None):
    """Pure-JAX reference mirroring the PyTorch forward.

    matmul_dtype=None reproduces the exact module semantics (f32); passing
    jnp.bfloat16 emulates the kernel's MXU operand precision for a tight check.
    """
    bs, width, length = qkv.shape
    ch = width // (3 * n_heads)
    q, k, v = jnp.split(qkv, 3, axis=1)
    if encoder_kv is not None:
        ek, ev = jnp.split(encoder_kv, 2, axis=1)
        k = jnp.concatenate([ek, k], axis=-1)
        v = jnp.concatenate([ev, v], axis=-1)
    scale2 = 1.0 / math.sqrt(ch)                         # both scales folded into q
    qh = (q * scale2).reshape(bs * n_heads, ch, length)
    kh = k.reshape(bs * n_heads, ch, -1)
    vh = v.reshape(bs * n_heads, ch, -1)
    if matmul_dtype is not None:
        qh, kh, vh = (x.astype(matmul_dtype) for x in (qh, kh, vh))
    w = jnp.einsum('bct,bcs->bts', qh, kh, preferred_element_type=jnp.float32)
    w = jax.nn.softmax(w, axis=-1)
    if matmul_dtype is not None:
        w = w.astype(matmul_dtype)
    a = jnp.einsum('bts,bcs->bct', w, vh,
                   preferred_element_type=jnp.float32).astype(qkv.dtype)
    return a.reshape(bs, -1, length)


if __name__ == "__main__":
    # Small shapes consistent with the module: N=2, n_heads=2, ch=16, T=8.
    n_heads = 2
    N, ch, T = 2, 16, 8
    width = 3 * n_heads * ch  # 96

    key = jax.random.PRNGKey(0)
    k1, k2 = jax.random.split(key)
    qkv = jax.random.normal(k1, (N, width, T), dtype=jnp.float32)

    # --- Self-attention path ---
    out = jax.block_until_ready(qkv_attention(qkv, n_heads))
    assert out.shape == (N, n_heads * ch, T)
    # Tight check against a matched-precision (bf16 MXU operands) reference.
    ref_bf16 = _reference_qkv_attention(qkv, n_heads, matmul_dtype=jnp.bfloat16)
    assert jnp.allclose(out, ref_bf16, atol=3e-2, rtol=3e-2), \
        float(jnp.max(jnp.abs(out - ref_bf16)))
    # Loose check against exact f32 module semantics (covers bf16 operand cast).
    ref_f32 = _reference_qkv_attention(qkv, n_heads)
    assert jnp.allclose(out, ref_f32, atol=1.5e-1, rtol=1.5e-1), \
        float(jnp.max(jnp.abs(out - ref_f32)))
    assert float(jnp.mean(jnp.abs(out - ref_f32))) < 2e-2

    # --- Cross-attention path (encoder_kv prepended to K/V) ---
    S_enc = 8
    enc = jax.random.normal(k2, (N, 2 * n_heads * ch, S_enc), dtype=jnp.float32)
    out2 = jax.block_until_ready(qkv_attention(qkv, n_heads, encoder_kv=enc))
    assert out2.shape == (N, n_heads * ch, T)
    ref2_bf16 = _reference_qkv_attention(qkv, n_heads, encoder_kv=enc,
                                         matmul_dtype=jnp.bfloat16)
    assert jnp.allclose(out2, ref2_bf16, atol=3e-2, rtol=3e-2), \
        float(jnp.max(jnp.abs(out2 - ref2_bf16)))
    ref2_f32 = _reference_qkv_attention(qkv, n_heads, encoder_kv=enc)
    assert jnp.allclose(out2, ref2_f32, atol=1.5e-1, rtol=1.5e-1), \
        float(jnp.max(jnp.abs(out2 - ref2_f32)))
    assert float(jnp.mean(jnp.abs(out2 - ref2_f32))) < 2e-2

    print("KERNEL_OK")
</pallas_src>

<mosaic_0001>
module attributes {stable_mosaic.version = 11 : i64} {
  func.func @_qkv_attn_kernel(%arg0: i32, %arg1: i32, %arg2: i32, %arg3: memref<1x2x16x8xf32, #tpu.memory_space<vmem>>, %arg4: memref<1x2x16x8xf32, #tpu.memory_space<vmem>>, %arg5: memref<1x2x16x8xf32, #tpu.memory_space<vmem>>, %arg6: memref<1x2x16x8xf32, #tpu.memory_space<vmem>>) attributes {dimension_semantics = [#tpu.dimension_semantics<parallel>, #tpu.dimension_semantics<parallel>, #tpu.dimension_semantics<arbitrary>], iteration_bounds = array<i64: 2, 1, 1>, scalar_prefetch = 0 : i64, scratch_operands = 0 : i64, tpu.core_type = #tpu.core_type<tc>, window_params = [{transform_indices = @transform_0, window_bounds = array<i64: 1, 2, 16, 8>}, {transform_indices = @transform_1, window_bounds = array<i64: 1, 2, 16, 8>}, {transform_indices = @transform_2, window_bounds = array<i64: 1, 2, 16, 8>}, {transform_indices = @transform_3, window_bounds = array<i64: 1, 2, 16, 8>}]} {
    %c0 = arith.constant 0 : index
    %c0_0 = arith.constant 0 : index
    %c0_1 = arith.constant 0 : index
    %c0_2 = arith.constant 0 : index
    %0 = vector.load %arg3[%c0, %c0_0, %c0_1, %c0_2] : memref<1x2x16x8xf32, #tpu.memory_space<vmem>>, vector<1x2x16x8xf32>
    %1 = vector.shape_cast %0 : vector<1x2x16x8xf32> to vector<2x16x8xf32>
    %cst = arith.constant 2.500000e-01 : f32
    %2 = vector.broadcast %cst : f32 to vector<2x16x8xf32>
    %3 = arith.mulf %1, %2 : vector<2x16x8xf32>
    %4 = arith.truncf %3 : vector<2x16x8xf32> to vector<2x16x8xbf16>
    %c0_3 = arith.constant 0 : index
    %c0_4 = arith.constant 0 : index
    %c0_5 = arith.constant 0 : index
    %c0_6 = arith.constant 0 : index
    %5 = vector.load %arg4[%c0_3, %c0_4, %c0_5, %c0_6] : memref<1x2x16x8xf32, #tpu.memory_space<vmem>>, vector<1x2x16x8xf32>
    %6 = vector.shape_cast %5 : vector<1x2x16x8xf32> to vector<2x16x8xf32>
    %7 = arith.truncf %6 : vector<2x16x8xf32> to vector<2x16x8xbf16>
    %c0_7 = arith.constant 0 : index
    %c0_8 = arith.constant 0 : index
    %c0_9 = arith.constant 0 : index
    %c0_10 = arith.constant 0 : index
    %8 = vector.load %arg5[%c0_7, %c0_8, %c0_9, %c0_10] : memref<1x2x16x8xf32, #tpu.memory_space<vmem>>, vector<1x2x16x8xf32>
    %9 = vector.shape_cast %8 : vector<1x2x16x8xf32> to vector<2x16x8xf32>
    %10 = arith.truncf %9 : vector<2x16x8xf32> to vector<2x16x8xbf16>
    %cst_11 = arith.constant dense<0.000000e+00> : vector<2x8x8xf32>
    %11 = tpu.matmul %4, %7, %cst_11 {dimension_numbers = #tpu.dot_dimension_numbers<[1], [1], [2], [2], [0, 0, 0, 2, 1, 2], [0], [0]>} : vector<2x16x8xbf16>, vector<2x16x8xbf16>, vector<2x8x8xf32> -> vector<2x8x8xf32>
    %cst_12 = arith.constant dense<0xFF800000> : vector<2x8xf32>
    %12 = vector.multi_reduction <maximumf>, %11, %cst_12 [2] : vector<2x8x8xf32> to vector<2x8xf32>
    %13 = vector.shape_cast %12 : vector<2x8xf32> to vector<2x8x1xf32>
    %14 = vector.broadcast %13 : vector<2x8x1xf32> to vector<2x8x8xf32>
    %15 = arith.subf %11, %14 : vector<2x8x8xf32>
    %16 = math.exp %15 : vector<2x8x8xf32>
    %cst_13 = arith.constant dense<0.000000e+00> : vector<2x8xf32>
    %17 = vector.multi_reduction <add>, %16, %cst_13 [2] : vector<2x8x8xf32> to vector<2x8xf32>
    %18 = arith.truncf %16 : vector<2x8x8xf32> to vector<2x8x8xbf16>
    %cst_14 = arith.constant dense<0.000000e+00> : vector<2x16x8xf32>
    %19 = tpu.matmul %10, %18, %cst_14 {dimension_numbers = #tpu.dot_dimension_numbers<[2], [2], [1], [1], [0, 0, 0, 1, 1, 1], [0], [0]>} : vector<2x16x8xbf16>, vector<2x8x8xbf16>, vector<2x16x8xf32> -> vector<2x16x8xf32>
    %20 = tpu.reciprocal %17 : vector<2x8xf32> -> vector<2x8xf32>
    %21 = vector.shape_cast %20 : vector<2x8xf32> to vector<2x1x8xf32>
    %22 = vector.broadcast %21 : vector<2x1x8xf32> to vector<2x16x8xf32>
    %23 = arith.mulf %19, %22 : vector<2x16x8xf32>
    %c0_15 = arith.constant 0 : index
    %c0_16 = arith.constant 0 : index
    %c0_17 = arith.constant 0 : index
    %c0_18 = arith.constant 0 : index
    %24 = vector.load %arg6[%c0_15, %c0_16, %c0_17, %c0_18] : memref<1x2x16x8xf32, #tpu.memory_space<vmem>>, vector<1x2x16x8xf32>
    %25 = vector.shape_cast %24 : vector<1x2x16x8xf32> to vector<2x16x8xf32>
    %26 = vector.shape_cast %23 : vector<2x16x8xf32> to vector<1x2x16x8xf32>
    tpu.vector_store %arg6[%c0_15, %c0_16, %c0_17, %c0_18], %26 {strides = array<i32>} : memref<1x2x16x8xf32, #tpu.memory_space<vmem>>, vector<1x2x16x8xf32>,
    return
  }
  func.func @transform_0(%arg0: i32, %arg1: i32, %arg2: i32) -> (i32, i32, i32, i32) {
    %c0_i32 = arith.constant 0 : i32
    %c0_i32_0 = arith.constant 0 : i32
    return %arg0, %arg1, %c0_i32, %arg2 : i32, i32, i32, i32
  }
  func.func @transform_1(%arg0: i32, %arg1: i32, %arg2: i32) -> (i32, i32, i32, i32) {
    %c1_i32 = arith.constant 1 : i32
    %0 = arith.addi %c1_i32, %arg1 : i32
    %c0_i32 = arith.constant 0 : i32
    %c0_i32_0 = arith.constant 0 : i32
    %c0_i32_1 = arith.constant 0 : i32
    return %arg0, %0, %c0_i32, %c0_i32_0 : i32, i32, i32, i32
  }
  func.func @transform_2(%arg0: i32, %arg1: i32, %arg2: i32) -> (i32, i32, i32, i32) {
    %c2_i32 = arith.constant 2 : i32
    %0 = arith.addi %c2_i32, %arg1 : i32
    %c0_i32 = arith.constant 0 : i32
    %c0_i32_0 = arith.constant 0 : i32
    %c0_i32_1 = arith.constant 0 : i32
    return %arg0, %0, %c0_i32, %c0_i32_0 : i32, i32, i32, i32
  }
  func.func @transform_3(%arg0: i32, %arg1: i32, %arg2: i32) -> (i32, i32, i32, i32) {
    %c0_i32 = arith.constant 0 : i32
    %c0_i32_0 = arith.constant 0 : i32
    return %arg0, %arg1, %c0_i32, %arg2 : i32, i32, i32, i32
  }
}

</mosaic_0001>

<llo_original>
// kernel: tpu_custom_call.1
$region0: #{tpu_custom_call.1}
  #allocation0 [shape = 'u32[]', space=smem, size = 0x4, offset = 0x4, fixed_abs, tag = 'smem constant byte address 0x4 - core index']
  #allocation1 [shape = 'u32[144,128]{1,0:T(1,128)}', space=vmem, size = 0x12000, scoped, tag = 'internal scratch']
  %s0 = inlined_call_operand.vmem [shape: f32[2,6,16,8], index: 0, kind: input, shape index: {}]
  %s1 = inlined_call_operand.vmem [shape: f32[2,6,16,8], index: 1, kind: input, shape index: {}]
  %s2 = inlined_call_operand.vmem [shape: f32[2,6,16,8], index: 2, kind: input, shape index: {}]
  %s3 = inlined_call_operand.vmem [shape: f32[2,2,16,8], index: 3, kind: output, shape index: {}]
  %s4 = sld [smem:[#allocation0]]
  $region45: #{tpu_custom_call.1} parent=0
    _
  %s6 = ssub.s32 1, %s4
  %s7 = scalar_select 0, %s6, %s4
  loop: start=0, step=1, limit=4
  $region2: #{tpu_custom_call.1} parent=0 // loop_pre_header
    _
  $region3: #{tpu_custom_call.1} parent=0 // loop_header
    %s9 = sphi 0, %s13
    %p10 = scmp.ge.s32.totalorder %s9, 4
    %s16 = sphi 0, %s35
    %s17 = sphi 0, %s31
    %s18 = sphi 0, %s27
    %s19 = sphi 0, %s16
    %s20 = sphi 0, %s17
    %s21 = sphi 0, %s18
    %s22 = sphi 0, %s19
    %s23 = sphi 0, %s20
    %s24 = sphi 0, %s21
    %s42 = sphi 0, %s44
    %s45 = sphi 0, %s42
    %s46 = sphi 0, %s45
    %s62 = sphi 0, %s46
    %s72 = sphi 0, %s74
    %s75 = sphi 0, %s72
    %s76 = sphi 0, %s75
    %s92 = sphi 0, %s76
    %s102 = sphi 0, %s104
    %s105 = sphi 0, %s102
    %s106 = sphi 0, %s105
    %s122 = sphi 0, %s106
    %s132 = sphi 0, %s134
    %s135 = sphi 0, %s132
    %s136 = sphi 0, %s135
    %s152 = sphi 0, %s136
  $region4: #{tpu_custom_call.1} parent=0 // loop_header_branch
    %12 = sbr.rel (%p10) target = $region8
  $region5: #{tpu_custom_call.1} parent=0 // loop_body
    %s14 = ssub.s32 %s9, 1
    %s15 = ssub.s32 %s9, 2
    %s25 = sadd.s32 1, %s18
    %p26 = scmp.ge.s32.totalorder %s25, 1
    %s27 = scalar_select %p26, 0, %s25
    %s28 = sadd.s32 1, %s17
    %s29 = scalar_select %p26, %s28, %s17
    %p30 = scmp.ge.s32.totalorder %s29, 1
    %s31 = scalar_select %p30, 0, %s29
    %s32 = sadd.s32 1, %s16
    %s33 = scalar_select %p30, %s32, %s16
    %p34 = scmp.ge.s32.totalorder %s33, 2
    %s35 = scalar_select %p34, 0, %s33
    %s36 = ssub.s32 %s16, %s35
    %s37 = ssub.s32 %s17, %s31
    %s38 = sor.u32 %s36, %s37
    %s39 = ssub.s32 %s18, %s27
    %s40 = sor.u32 %s38, %s39
    %p41 = scmp.eq.s32.totalorder %s40, 0
    %s43 = sadd.s32 %s42, 1
    %s44 = scalar_select %p41, %s42, %s43
    %p47 = pneg %p41
    %p48 = scmp.eq.s32.totalorder %s9, 1
    %p49 = por %p47, %p48
    %p50 = scmp.ne.s32.totalorder %s42, %s45
    %p51 = scmp.eq.s32.totalorder %s9, 0
    %p52 = por %p50, %p51
    %p53 = scmp.ne.s32.totalorder %s42, %s45
    %p54 = scmp.eq.s32.totalorder %s14, 1
    %p55 = por %p53, %p54
    %p56 = scmp.ne.s32.totalorder %s45, %s46
    %p57 = scmp.eq.s32.totalorder %s14, 0
    %p58 = por %p56, %p57
    %p59 = scmp.ne.s32.totalorder %s45, %s46
    %p60 = scmp.eq.s32.totalorder %s15, 1
    %p61 = por %p59, %p60
    %p63 = scmp.ne.s32.totalorder %s46, %s62
    %p64 = scmp.eq.s32.totalorder %s15, 0
    %p65 = por %p63, %p64
    %s66 = sadd.s32 %s17, 1
    %s67 = sadd.s32 %s31, 1
    %s68 = ssub.s32 %s16, %s35
    %s69 = ssub.s32 %s66, %s67
    %s70 = sor.u32 %s68, %s69
    %p71 = scmp.eq.s32.totalorder %s70, 0
    %s73 = sadd.s32 %s72, 1
    %s74 = scalar_select %p71, %s72, %s73
    %p77 = pneg %p71
    %p78 = scmp.eq.s32.totalorder %s9, 1
    %p79 = por %p77, %p78
    %p80 = scmp.ne.s32.totalorder %s72, %s75
    %p81 = scmp.eq.s32.totalorder %s9, 0
    %p82 = por %p80, %p81
    %p83 = scmp.ne.s32.totalorder %s72, %s75
    %p84 = scmp.eq.s32.totalorder %s14, 1
    %p85 = por %p83, %p84
    %p86 = scmp.ne.s32.totalorder %s75, %s76
    %p87 = scmp.eq.s32.totalorder %s14, 0
    %p88 = por %p86, %p87
    %p89 = scmp.ne.s32.totalorder %s75, %s76
    %p90 = scmp.eq.s32.totalorder %s15, 1
    %p91 = por %p89, %p90
    %p93 = scmp.ne.s32.totalorder %s76, %s92
    %p94 = scmp.eq.s32.totalorder %s15, 0
    %p95 = por %p93, %p94
    %s96 = sadd.s32 %s17, 2
    %s97 = sadd.s32 %s31, 2
    %s98 = ssub.s32 %s16, %s35
    %s99 = ssub.s32 %s96, %s97
    %s100 = sor.u32 %s98, %s99
    %p101 = scmp.eq.s32.totalorder %s100, 0
    %s103 = sadd.s32 %s102, 1
    %s104 = scalar_select %p101, %s102, %s103
    %p107 = pneg %p101
    %p108 = scmp.eq.s32.totalorder %s9, 1
    %p109 = por %p107, %p108
    %p110 = scmp.ne.s32.totalorder %s102, %s105
    %p111 = scmp.eq.s32.totalorder %s9, 0
    %p112 = por %p110, %p111
    %p113 = scmp.ne.s32.totalorder %s102, %s105
    %p114 = scmp.eq.s32.totalorder %s14, 1
    %p115 = por %p113, %p114
    %p116 = scmp.ne.s32.totalorder %s105, %s106
    %p117 = scmp.eq.s32.totalorder %s14, 0
    %p118 = por %p116, %p117
    %p119 = scmp.ne.s32.totalorder %s105, %s106
    %p120 = scmp.eq.s32.totalorder %s15, 1
    %p121 = por %p119, %p120
    %p123 = scmp.ne.s32.totalorder %s106, %s122
    %p124 = scmp.eq.s32.totalorder %s15, 0
    %p125 = por %p123, %p124
    %s126 = ssub.s32 %s16, %s35
    %s127 = ssub.s32 %s17, %s31
    %s128 = sor.u32 %s126, %s127
    %s129 = ssub.s32 %s18, %s27
    %s130 = sor.u32 %s128, %s129
    %p131 = scmp.eq.s32.totalorder %s130, 0
    %s133 = sadd.s32 %s132, 1
    %s134 = scalar_select %p131, %s132, %s133
    %p137 = pneg %p131
    %p138 = scmp.eq.s32.totalorder %s9, 1
    %p139 = por %p137, %p138
    %p140 = scmp.ne.s32.totalorder %s132, %s135
    %p141 = scmp.eq.s32.totalorder %s9, 0
    %p142 = por %p140, %p141
    %p143 = scmp.ne.s32.totalorder %s132, %s135
    %p144 = scmp.eq.s32.totalorder %s14, 1
    %p145 = por %p143, %p144
    %p146 = scmp.ne.s32.totalorder %s135, %s136
    %p147 = scmp.eq.s32.totalorder %s14, 0
    %p148 = por %p146, %p147
    %p149 = scmp.ne.s32.totalorder %s135, %s136
    %p150 = scmp.eq.s32.totalorder %s15, 1
    %p151 = por %p149, %p150
    %p153 = scmp.ne.s32.totalorder %s136, %s152
    %p154 = scmp.eq.s32.totalorder %s15, 0
    %p155 = por %p153, %p154
    %p156 = scmp.le.s32.totalorder 1, %s9
    %p157 = scmp.lt.s32.totalorder %s9, 3
    %p158 = pnand %p156, %p157
    %p159 = pneg %p158
    // Predicated region
    $region9: #{tpu_custom_call.1} parent=5 // pred_check
      _
    $region10: #{tpu_custom_call.1} parent=5 // pred_check_branch
      %161 = sbr.rel (%p158) target = $region12
    $region11: #{tpu_custom_call.1} parent=5 // pred_region
      %s162 = ssub.s32 %s9, 1
    $region12: #{tpu_custom_call.1} parent=5 // pred_fallthru
      _
    %p163 = scmp.lt.s32.totalorder %s9, 2
    // Predicated region
    $region13: #{tpu_custom_call.1} parent=5 // pred_check
      %p164 = pneg %p163
    $region14: #{tpu_custom_call.1} parent=5 // pred_check_branch
      %166 = sbr.rel (%p164) target = $region16
    $region15: #{tpu_custom_call.1} parent=5 // pred_region
      // Predicated region
      $region17: #{tpu_custom_call.1} parent=15 // pred_check
        %p167 = pneg %p52
      $region18: #{tpu_custom_call.1} parent=15 // pred_check_branch
        %169 = sbr.rel (%p167) target = $region20
      $region19: #{tpu_custom_call.1} parent=15 // pred_region
        %s170 = smul.u32 2, %s17
        %p171 = scmp.lt.s32.totalorder %s16, 1
        %s172 = scalar_select %p171, %s16, 1
        %p173 = scmp.lt.s32.totalorder %s170, 5
        %s174 = scalar_select %p173, %s170, 5
        %p175 = scmp.lt.s32.totalorder %s18, 0
        %s176 = scalar_select %p175, %s18, 0
        %s177 = smul.addr %s174, 2
        %s178 = sadd.s32 %s176, %s177
        %s179 = smul.addr %s172, 12
        %s180 = sadd.s32 %s178, %s179
        %s181 = smul.addr %s180, 8
        %s182 = scalar_lea.vmem %s0, %s181
        %s183 = smul.u32 2, %s17
      $region20: #{tpu_custom_call.1} parent=15 // pred_fallthru
        _
      // Predicated region
      $region21: #{tpu_custom_call.1} parent=15 // pred_check
        %p184 = pneg %p82
      $region22: #{tpu_custom_call.1} parent=15 // pred_check_branch
        %186 = sbr.rel (%p184) target = $region24
      $region23: #{tpu_custom_call.1} parent=15 // pred_region
        %s187 = sadd.s32 %s17, 1
        %s188 = smul.u32 2, %s187
        %p189 = scmp.lt.s32.totalorder %s16, 1
        %s190 = scalar_select %p189, %s16, 1
        %p191 = scmp.lt.s32.totalorder %s188, 5
        %s192 = scalar_select %p191, %s188, 5
        %s193 = smul.addr %s192, 2
        %s194 = smul.addr %s190, 12
        %s195 = sadd.s32 %s193, %s194
        %s196 = smul.addr %s195, 8
        %s197 = scalar_lea.vmem %s1, %s196
        %s198 = sadd.s32 %s17, 1
        %s199 = smul.u32 2, %s198
      $region24: #{tpu_custom_call.1} parent=15 // pred_fallthru
        _
      // Predicated region
      $region25: #{tpu_custom_call.1} parent=15 // pred_check
        %p200 = pneg %p112
      $region26: #{tpu_custom_call.1} parent=15 // pred_check_branch
        %202 = sbr.rel (%p200) target = $region28
      $region27: #{tpu_custom_call.1} parent=15 // pred_region
        %s203 = sadd.s32 %s17, 2
        %s204 = smul.u32 2, %s203
        %p205 = scmp.lt.s32.totalorder %s16, 1
        %s206 = scalar_select %p205, %s16, 1
        %p207 = scmp.lt.s32.totalorder %s204, 5
        %s208 = scalar_select %p207, %s204, 5
        %s209 = smul.addr %s208, 2
        %s210 = smul.addr %s206, 12
        %s211 = sadd.s32 %s209, %s210
        %s212 = smul.addr %s211, 8
        %s213 = scalar_lea.vmem %s2, %s212
        %s214 = sadd.s32 %s17, 2
        %s215 = smul.u32 2, %s214
      $region28: #{tpu_custom_call.1} parent=15 // pred_fallthru
        _
    $region16: #{tpu_custom_call.1} parent=5 // pred_fallthru
      _
    %p216 = scmp.le.s32.totalorder 1, %s9
    %p217 = scmp.lt.s32.totalorder %s9, 3
    %p218 = pnand %p216, %p217
    %p219 = pneg %p218
    // Predicated region
    $region29: #{tpu_custom_call.1} parent=5 // pred_check
      _
    $region30: #{tpu_custom_call.1} parent=5 // pred_check_branch
      %221 = sbr.rel (%p218) target = $region32
    $region31: #{tpu_custom_call.1} parent=5 // pred_region
      %s222 = ssub.s32 %s9, 1
      %s223 = smul.u32 2, %s20
      %p224 = scmp.lt.s32.totalorder %s19, 1
      %s225 = scalar_select %p224, %s19, 1
      %p226 = scmp.lt.s32.totalorder %s223, 5
      %s227 = scalar_select %p226, %s223, 5
      %p228 = scmp.lt.s32.totalorder %s21, 0
      %s229 = scalar_select %p228, %s21, 0
      %s230 = smul.addr %s227, 2
      %s231 = sadd.s32 %s229, %s230
      %s232 = smul.addr %s225, 12
      %s233 = sadd.s32 %s231, %s232
      %s234 = smul.addr %s233, 8
      %s235 = scalar_lea.vmem %s0, %s234
      %p236 = pneg %p58
      %p237 = pneg %p55
      %s238 = sadd.s32 %s20, 1
      %s239 = smul.u32 2, %s238
      %p240 = scmp.lt.s32.totalorder %s19, 1
      %s241 = scalar_select %p240, %s19, 1
      %p242 = scmp.lt.s32.totalorder %s239, 5
      %s243 = scalar_select %p242, %s239, 5
      %s244 = smul.addr %s243, 2
      %s245 = smul.addr %s241, 12
      %s246 = sadd.s32 %s244, %s245
      %s247 = smul.addr %s246, 8
      %s248 = scalar_lea.vmem %s1, %s247
      %p249 = pneg %p88
      %p250 = pneg %p85
      %s251 = sadd.s32 %s20, 2
      %s252 = smul.u32 2, %s251
      %p253 = scmp.lt.s32.totalorder %s19, 1
      %s254 = scalar_select %p253, %s19, 1
      %p255 = scmp.lt.s32.totalorder %s252, 5
      %s256 = scalar_select %p255, %s252, 5
      %s257 = smul.addr %s256, 2
      %s258 = smul.addr %s254, 12
      %s259 = sadd.s32 %s257, %s258
      %s260 = smul.addr %s259, 8
      %s261 = scalar_lea.vmem %s2, %s260
      %p262 = pneg %p118
      %p263 = pneg %p115
      %p264 = pneg %p148
      %p265 = pneg %p145
      %s266 = smul.u32 2, %s20
      %p267 = scmp.lt.s32.totalorder %s19, 1
      %s268 = scalar_select %p267, %s19, 1
      %p269 = scmp.lt.s32.totalorder %s266, 1
      %s270 = scalar_select %p269, %s266, 1
      %p271 = scmp.lt.s32.totalorder %s21, 0
      %s272 = scalar_select %p271, %s21, 0
      %s273 = smul.addr %s270, 2
      %s274 = sadd.s32 %s272, %s273
      %s275 = smul.addr %s268, 4
      %s276 = sadd.s32 %s274, %s275
      %s277 = smul.addr %s276, 8
      %s278 = scalar_lea.vmem %s3, %s277
      %s279 = smul.u32 2, %s20
      %p280 = scmp.lt.s32.totalorder %s19, 1
      %s281 = scalar_select %p280, %s19, 1
      %p282 = scmp.lt.s32.totalorder %s279, 5
      %s283 = scalar_select %p282, %s279, 5
      %p284 = scmp.lt.s32.totalorder %s21, 0
      %s285 = scalar_select %p284, %s21, 0
      %s286 = smul.addr %s283, 2
      %s287 = sadd.s32 %s285, %s286
      %s288 = smul.addr %s281, 12
      %s289 = sadd.s32 %s287, %s288
      %s290 = smul.addr %s289, 8
      %s291 = scalar_lea.vmem %s0, %s290
      %s292 = smul.u32 2, %s20
      %s293 = sadd.s32 %s20, 1
      %s294 = smul.u32 2, %s293
      %p295 = scmp.lt.s32.totalorder %s19, 1
      %s296 = scalar_select %p295, %s19, 1
      %p297 = scmp.lt.s32.totalorder %s294, 5
      %s298 = scalar_select %p297, %s294, 5
      %s299 = smul.addr %s298, 2
      %s300 = smul.addr %s296, 12
      %s301 = sadd.s32 %s299, %s300
      %s302 = smul.addr %s301, 8
      %s303 = scalar_lea.vmem %s1, %s302
      %s304 = sadd.s32 %s20, 1
      %s305 = smul.u32 2, %s304
      %s306 = sadd.s32 %s20, 2
      %s307 = smul.u32 2, %s306
      %p308 = scmp.lt.s32.totalorder %s19, 1
      %s309 = scalar_select %p308, %s19, 1
      %p310 = scmp.lt.s32.totalorder %s307, 5
      %s311 = scalar_select %p310, %s307, 5
      %s312 = smul.addr %s311, 2
      %s313 = smul.addr %s309, 12
      %s314 = sadd.s32 %s312, %s313
      %s315 = smul.addr %s314, 8
      %s316 = scalar_lea.vmem %s2, %s315
      %s317 = sadd.s32 %s20, 2
      %s318 = smul.u32 2, %s317
      %s319 = smul.u32 2, %s20
      %p320 = scmp.lt.s32.totalorder %s19, 1
      %s321 = scalar_select %p320, %s19, 1
      %p322 = scmp.lt.s32.totalorder %s319, 1
      %s323 = scalar_select %p322, %s319, 1
      %p324 = scmp.lt.s32.totalorder %s21, 0
      %s325 = scalar_select %p324, %s21, 0
      %s326 = smul.addr %s323, 2
      %s327 = sadd.s32 %s325, %s326
      %s328 = smul.addr %s321, 4
      %s329 = sadd.s32 %s327, %s328
      %s330 = smul.addr %s329, 8
      %s331 = scalar_lea.vmem %s3, %s330
      %s332 = smul.u32 2, %s20
      %v334 = vld [vmem:[%s291] sm:$0xff]
      %v335 = vld [vmem:[%s291 + $0x8] sm:$0xff]
      %v336 = vld [vmem:[%s291 + $0x10] sm:$0xff]
      %v337 = vld [vmem:[%s291 + $0x18] sm:$0xff]
      %v338 = vmul.f32 %v334, 0.25
      %v339 = vmul.f32 %v335, 0.25
      %v340 = vmul.f32 %v336, 0.25
      %v341 = vmul.f32 %v337, 0.25
      %v342 = vpack.c.bf16 %v339, %v338
      %v343 = vpack.c.bf16 %v341, %v340
      %v344 = vld [vmem:[%s303] sm:$0xff]
      %v345 = vld [vmem:[%s303 + $0x8] sm:$0xff]
      %v346 = vld [vmem:[%s303 + $0x10] sm:$0xff]
      %v347 = vld [vmem:[%s303 + $0x18] sm:$0xff]
      %v348 = vpack.c.bf16 %v345, %v344
      %v349 = vpack.c.bf16 %v347, %v346
      %v350 = vld [vmem:[%s316] sm:$0xff]
      %v351 = vld [vmem:[%s316 + $0x8] sm:$0xff]
      %v352 = vld [vmem:[%s316 + $0x10] sm:$0xff]
      %v353 = vld [vmem:[%s316 + $0x18] sm:$0xff]
      %v354 = vpack.c.bf16 %v351, %v350
      %v355 = vpack.c.bf16 %v353, %v352
      %356 = vxpose.xlu0.c.b16.start [1/8] %v342, 128
      %357 = vxpose.xlu0.c.b16.cont [2/8] 0, 128
      %358 = vxpose.xlu0.c.b16.cont [3/8] 0, 128
      %359 = vxpose.xlu0.c.b16.cont [4/8] 0, 128
      %360 = vxpose.xlu0.c.b16.cont [5/8] 0, 128
      %361 = vxpose.xlu0.c.b16.cont [6/8] 0, 128
      %362 = vxpose.xlu0.c.b16.cont [7/8] 0, 128
      %363 = vxpose.xlu0.c.b16.end [8/8] 0, 128
      %v364 = vpop.trf.xlu0
      %v365 = vpop.trf.xlu0
      %v366 = vpop.trf.xlu0
      %v367 = vpop.trf.xlu0
      %v368 = vpop.trf.xlu0
      %v369 = vpop.trf.xlu0
      %v370 = vpop.trf.xlu0
      %v371 = vpop.trf.xlu0
      %vm372 = vcmask 130048
      %v374 = vsel %vm372, %v364, 0
      %376 = vmatprep.subr.bf16.mxu0 0
      %377 = vmatpush1.bf16.msra.mxu0 %v348
      %378 = vmatprep.subr.bf16.mxu0 0
      %379 = vmatpush1.bf16.msra.mxu0 0
      %380 = vmatprep.subr.bf16.mxu0 0
      %381 = vmatpush1.bf16.msra.mxu0 0
      %382 = vmatprep.subr.bf16.mxu0 0
      %383 = vmatpush1.bf16.msra.mxu0 0
      %384 = vmatprep.subr.bf16.mxu0 0
      %385 = vmatpush1.bf16.msra.mxu0 0
      %386 = vmatprep.subr.bf16.mxu0 0
      %387 = vmatpush1.bf16.msra.mxu0 0
      %388 = vmatprep.subr.bf16.mxu0 0
      %389 = vmatpush1.bf16.msra.mxu0 0
      %390 = vmatprep.subr.bf16.mxu0 0
      %391 = vmatpush1.bf16.msra.mxu0 0
      %392 = vmatprep.subr.bf16.mxu0 0
      %393 = vmatpush1.bf16.msra.mxu0 0
      %394 = vmatprep.subr.bf16.mxu0 0
      %395 = vmatpush1.bf16.msra.mxu0 0
      %396 = vmatprep.subr.bf16.mxu0 0
      %397 = vmatpush1.bf16.msra.mxu0 0
      %398 = vmatprep.subr.bf16.mxu0 0
      %399 = vmatpush1.bf16.msra.mxu0 0
      %400 = vmatprep.subr.bf16.mxu0 0
      %401 = vmatpush1.bf16.msra.mxu0 0
      %402 = vmatprep.subr.bf16.mxu0 0
      %403 = vmatpush1.bf16.msra.mxu0 0
      %404 = vmatprep.subr.bf16.mxu0 0
      %405 = vmatpush1.bf16.msra.mxu0 0
      %406 = vmatprep.subr.bf16.mxu0 0
      %407 = vmatpush1.bf16.msra.mxu0 0
      %408 = vmatprep.mubr.bf16.mxu0 0
      %409 = vmatmul.mubr.bf16.gmra.mrb[0].mxu0 %v374
      %v410 = vpop.f32.mrb[0].mxu0
      %v411 = vadd.f32 0.0, %v410
      %v412 = vpop.f32.mrb[0].mxu0
      %v413 = vpop.f32.mrb[0].mxu0
      %v414 = vpop.f32.mrb[0].mxu0
      %415 = vdwg.mxu0
      %416 = vxpose.xlu0.c.b16.start [1/8] %v343, 128
      %417 = vxpose.xlu0.c.b16.cont [2/8] 0, 128
      %418 = vxpose.xlu0.c.b16.cont [3/8] 0, 128
      %419 = vxpose.xlu0.c.b16.cont [4/8] 0, 128
      %420 = vxpose.xlu0.c.b16.cont [5/8] 0, 128
      %421 = vxpose.xlu0.c.b16.cont [6/8] 0, 128
      %422 = vxpose.xlu0.c.b16.cont [7/8] 0, 128
      %423 = vxpose.xlu0.c.b16.end [8/8] 0, 128
      %v424 = vpop.trf.xlu0
      %v425 = vpop.trf.xlu0
      %v426 = vpop.trf.xlu0
      %v427 = vpop.trf.xlu0
      %v428 = vpop.trf.xlu0
      %v429 = vpop.trf.xlu0
      %v430 = vpop.trf.xlu0
      %v431 = vpop.trf.xlu0
      %v433 = vsel %vm372, %v424, 0
      %435 = vmatprep.subr.bf16.mxu0 0
      %436 = vmatpush1.bf16.msra.mxu0 %v349
      %437 = vmatprep.subr.bf16.mxu0 0
      %438 = vmatpush1.bf16.msra.mxu0 0
      %439 = vmatprep.subr.bf16.mxu0 0
      %440 = vmatpush1.bf16.msra.mxu0 0
      %441 = vmatprep.subr.bf16.mxu0 0
      %442 = vmatpush1.bf16.msra.mxu0 0
      %443 = vmatprep.subr.bf16.mxu0 0
      %444 = vmatpush1.bf16.msra.mxu0 0
      %445 = vmatprep.subr.bf16.mxu0 0
      %446 = vmatpush1.bf16.msra.mxu0 0
      %447 = vmatprep.subr.bf16.mxu0 0
      %448 = vmatpush1.bf16.msra.mxu0 0
      %449 = vmatprep.subr.bf16.mxu0 0
      %450 = vmatpush1.bf16.msra.mxu0 0
      %451 = vmatprep.subr.bf16.mxu0 0
      %452 = vmatpush1.bf16.msra.mxu0 0
      %453 = vmatprep.subr.bf16.mxu0 0
      %454 = vmatpush1.bf16.msra.mxu0 0
      %455 = vmatprep.subr.bf16.mxu0 0
      %456 = vmatpush1.bf16.msra.mxu0 0
      %457 = vmatprep.subr.bf16.mxu0 0
      %458 = vmatpush1.bf16.msra.mxu0 0
      %459 = vmatprep.subr.bf16.mxu0 0
      %460 = vmatpush1.bf16.msra.mxu0 0
      %461 = vmatprep.subr.bf16.mxu0 0
      %462 = vmatpush1.bf16.msra.mxu0 0
      %463 = vmatprep.subr.bf16.mxu0 0
      %464 = vmatpush1.bf16.msra.mxu0 0
      %465 = vmatprep.subr.bf16.mxu0 0
      %466 = vmatpush1.bf16.msra.mxu0 0
      %467 = vmatprep.mubr.bf16.mxu0 0
      %468 = vmatmul.mubr.bf16.gmra.mrb[0].mxu0 %v433
      %v469 = vpop.f32.mrb[0].mxu0
      %v470 = vadd.f32 0.0, %v469
      %v471 = vpop.f32.mrb[0].mxu0
      %v472 = vpop.f32.mrb[0].mxu0
      %v473 = vpop.f32.mrb[0].mxu0
      %474 = vdwg.mxu0
      %vm475 = vcmask 64512
      %v476 = vsel %vm475, %v411, -inf
      %477 = vmax.xlane.f32.xlu0 %v476
      %v478 = vpop.xlane.xlu0 %477
      %v479 = vsel %vm475, %v470, -inf
      %480 = vmax.xlane.f32.xlu0 %v479
      %v481 = vpop.xlane.xlu0 %480
      %v482 = vsub.f32 %v411, %v478
      %v483 = vsub.f32 %v470, %v481
      %v484 = vmul.f32 %v482, 1.442695
      %v485 = vpow.pop %v484
      %v486 = vmul.f32 %v483, 1.442695
      %v487 = vpow.pop %v486
      %v488 = vsel %vm475, %v485, 0.0
      %489 = vadd.xlane.f32.xlu0 %v488
      %v490 = vpop.xlane.xlu0 %489
      %v491 = vsel %vm475, %v487, 0.0
      %492 = vadd.xlane.f32.xlu0 %v491
      %v493 = vpop.xlane.xlu0 %492
      %v494 = vpack.c.bf16 %v485, %v485
      %v495 = vpack.c.bf16 %v487, %v487
      %v497 = vsel %vm475, %v354, 0
      %v500 = vsel %vm475, %v494, 0
      %502 = vmatprep.subr.bf16.mxu0 0
      %503 = vmatpush1.bf16.xpose.msra.mxu0 %v500
      %504 = vmatprep.subr.bf16.mxu0 0
      %505 = vmatpush1.bf16.xpose.msra.mxu0 0
      %506 = vmatprep.subr.bf16.mxu0 0
      %507 = vmatpush1.bf16.xpose.msra.mxu0 0
      %508 = vmatprep.subr.bf16.mxu0 0
      %509 = vmatpush1.bf16.xpose.msra.mxu0 0
      %510 = vmatprep.subr.bf16.mxu0 0
      %511 = vmatpush1.bf16.xpose.msra.mxu0 0
      %512 = vmatprep.subr.bf16.mxu0 0
      %513 = vmatpush1.bf16.xpose.msra.mxu0 0
      %514 = vmatprep.subr.bf16.mxu0 0
      %515 = vmatpush1.bf16.xpose.msra.mxu0 0
      %516 = vmatprep.subr.bf16.mxu0 0
      %517 = vmatpush1.bf16.xpose.msra.mxu0 0
      %518 = vmatprep.subr.bf16.mxu0 0
      %519 = vmatpush1.bf16.xpose.msra.mxu0 0
      %520 = vmatprep.subr.bf16.mxu0 0
      %521 = vmatpush1.bf16.xpose.msra.mxu0 0
      %522 = vmatprep.subr.bf16.mxu0 0
      %523 = vmatpush1.bf16.xpose.msra.mxu0 0
      %524 = vmatprep.subr.bf16.mxu0 0
      %525 = vmatpush1.bf16.xpose.msra.mxu0 0
      %526 = vmatprep.subr.bf16.mxu0 0
      %527 = vmatpush1.bf16.xpose.msra.mxu0 0
      %528 = vmatprep.subr.bf16.mxu0 0
      %529 = vmatpush1.bf16.xpose.msra.mxu0 0
      %530 = vmatprep.subr.bf16.mxu0 0
      %531 = vmatpush1.bf16.xpose.msra.mxu0 0
      %532 = vmatprep.subr.bf16.mxu0 0
      %533 = vmatpush1.bf16.xpose.msra.mxu0 0
      %534 = vmatprep.mubr.bf16.mxu0 0
      %535 = vmatmul.mubr.bf16.gmra.mrb[0].mxu0 %v497
      %v536 = vpop.f32.mrb[0].mxu0
      %v537 = vadd.f32 0.0, %v536
      %v538 = vpop.f32.mrb[0].mxu0
      %v539 = vpop.f32.mrb[0].mxu0
      %v540 = vadd.f32 0.0, %v539
      %v541 = vpop.f32.mrb[0].mxu0
      %542 = vdwg.mxu0
      %v544 = vsel %vm475, %v355, 0
      %v547 = vsel %vm475, %v495, 0
      %549 = vmatprep.subr.bf16.mxu0 0
      %550 = vmatpush1.bf16.xpose.msra.mxu0 %v547
      %551 = vmatprep.subr.bf16.mxu0 0
      %552 = vmatpush1.bf16.xpose.msra.mxu0 0
      %553 = vmatprep.subr.bf16.mxu0 0
      %554 = vmatpush1.bf16.xpose.msra.mxu0 0
      %555 = vmatprep.subr.bf16.mxu0 0
      %556 = vmatpush1.bf16.xpose.msra.mxu0 0
      %557 = vmatprep.subr.bf16.mxu0 0
      %558 = vmatpush1.bf16.xpose.msra.mxu0 0
      %559 = vmatprep.subr.bf16.mxu0 0
      %560 = vmatpush1.bf16.xpose.msra.mxu0 0
      %561 = vmatprep.subr.bf16.mxu0 0
      %562 = vmatpush1.bf16.xpose.msra.mxu0 0
      %563 = vmatprep.subr.bf16.mxu0 0
      %564 = vmatpush1.bf16.xpose.msra.mxu0 0
      %565 = vmatprep.subr.bf16.mxu0 0
      %566 = vmatpush1.bf16.xpose.msra.mxu0 0
      %567 = vmatprep.subr.bf16.mxu0 0
      %568 = vmatpush1.bf16.xpose.msra.mxu0 0
      %569 = vmatprep.subr.bf16.mxu0 0
      %570 = vmatpush1.bf16.xpose.msra.mxu0 0
      %571 = vmatprep.subr.bf16.mxu0 0
      %572 = vmatpush1.bf16.xpose.msra.mxu0 0
      %573 = vmatprep.subr.bf16.mxu0 0
      %574 = vmatpush1.bf16.xpose.msra.mxu0 0
      %575 = vmatprep.subr.bf16.mxu0 0
      %576 = vmatpush1.bf16.xpose.msra.mxu0 0
      %577 = vmatprep.subr.bf16.mxu0 0
      %578 = vmatpush1.bf16.xpose.msra.mxu0 0
      %579 = vmatprep.subr.bf16.mxu0 0
      %580 = vmatpush1.bf16.xpose.msra.mxu0 0
      %581 = vmatprep.mubr.bf16.mxu0 0
      %582 = vmatmul.mubr.bf16.gmra.mrb[0].mxu0 %v544
      %v583 = vpop.f32.mrb[0].mxu0
      %v584 = vadd.f32 0.0, %v583
      %v585 = vpop.f32.mrb[0].mxu0
      %v586 = vpop.f32.mrb[0].mxu0
      %v587 = vadd.f32 0.0, %v586
      %v588 = vpop.f32.mrb[0].mxu0
      %589 = vdwg.mxu0
      %v590 = vrcp.pop %v490
      %v591 = vrcp.pop %v493
      %v594 = vlaneseq
      %v595 = vand.u32 %v594, 127
      %v596 = vlaneseq
      %v597 = vshrl.u32 %v596, 7
      %v598 = vsub.s32 %v595, %v597
      %v599 = vrot.slane %v590, %v598
      %v600 = vlaneseq
      %v601 = vshrl.u32 %v600, 7
      %v602 = vsub.s32 %v595, %v601
      %v603 = vrot.slane %v591, %v602
      %vm604 = vcmask 1042434
      %v605 = vsel %vm604, %v599, %v599
      %vm606 = vcmask 1043459
      %v607 = vsel %vm606, %v599, %v605
      %vm608 = vcmask 1044484
      %v609 = vsel %vm608, %v599, %v607
      %vm610 = vcmask 1045509
      %v611 = vsel %vm610, %v599, %v609
      %vm612 = vcmask 1046534
      %v613 = vsel %vm612, %v599, %v611
      %vm614 = vcmask 1047559
      %v615 = vsel %vm614, %v599, %v613
      %v616 = vsel %vm604, %v603, %v603
      %v617 = vsel %vm606, %v603, %v616
      %v618 = vsel %vm608, %v603, %v617
      %v619 = vsel %vm610, %v603, %v618
      %v620 = vsel %vm612, %v603, %v619
      %v621 = vsel %vm614, %v603, %v620
      %v624 = vmul.f32 %v537, %v615
      %v625 = vmul.f32 %v540, %v615
      %v626 = vmul.f32 %v584, %v621
      %v627 = vmul.f32 %v587, %v621
      %628 = vst.msk [vmem:[%s331] sm:$0xff] %vm475, %v624
      %629 = vst.msk [vmem:[%s331 + $0x8] sm:$0xff] %vm475, %v625
      %630 = vst.msk [vmem:[%s331 + $0x10] sm:$0xff] %vm475, %v626
      %631 = vst.msk [vmem:[%s331 + $0x18] sm:$0xff] %vm475, %v627
      %s632 = smul.u32 2, %s20
      %p633 = scmp.lt.s32.totalorder %s19, 1
      %s634 = scalar_select %p633, %s19, 1
      %p635 = scmp.lt.s32.totalorder %s632, 1
      %s636 = scalar_select %p635, %s632, 1
      %p637 = scmp.lt.s32.totalorder %s21, 0
      %s638 = scalar_select %p637, %s21, 0
      %s639 = smul.addr %s636, 2
      %s640 = sadd.s32 %s638, %s639
      %s641 = smul.addr %s634, 4
      %s642 = sadd.s32 %s640, %s641
      %s643 = smul.addr %s642, 8
      %s644 = scalar_lea.vmem %s3, %s643
      // Predicated region
      $region33: #{tpu_custom_call.1} parent=31 // pred_check
        %p645 = pneg %p145
      $region34: #{tpu_custom_call.1} parent=31 // pred_check_branch
        %647 = sbr.rel (%p645) target = $region36
      $region35: #{tpu_custom_call.1} parent=31 // pred_region
        %s648 = smul.u32 2, %s20
      $region36: #{tpu_custom_call.1} parent=31 // pred_fallthru
        _
    $region32: #{tpu_custom_call.1} parent=5 // pred_fallthru
      _
    %p649 = scmp.le.s32.totalorder 2, %s9
    // Predicated region
    $region37: #{tpu_custom_call.1} parent=5 // pred_check
      %p650 = pneg %p649
    $region38: #{tpu_custom_call.1} parent=5 // pred_check_branch
      %652 = sbr.rel (%p650) target = $region40
    $region39: #{tpu_custom_call.1} parent=5 // pred_region
      %s653 = ssub.s32 %s9, 2
      // Predicated region
      $region41: #{tpu_custom_call.1} parent=39 // pred_check
        %p654 = pneg %p151
      $region42: #{tpu_custom_call.1} parent=39 // pred_check_branch
        %656 = sbr.rel (%p654) target = $region44
      $region43: #{tpu_custom_call.1} parent=39 // pred_region
        %s657 = smul.u32 2, %s23
        %p658 = scmp.lt.s32.totalorder %s22, 1
        %s659 = scalar_select %p658, %s22, 1
        %p660 = scmp.lt.s32.totalorder %s657, 1
        %s661 = scalar_select %p660, %s657, 1
        %p662 = scmp.lt.s32.totalorder %s24, 0
        %s663 = scalar_select %p662, %s24, 0
        %s664 = smul.addr %s661, 2
        %s665 = sadd.s32 %s663, %s664
        %s666 = smul.addr %s659, 4
        %s667 = sadd.s32 %s665, %s666
        %s668 = smul.addr %s667, 8
        %s669 = scalar_lea.vmem %s3, %s668
      $region44: #{tpu_custom_call.1} parent=39 // pred_fallthru
        _
    $region40: #{tpu_custom_call.1} parent=5 // pred_fallthru
      _
  $region6: #{tpu_custom_call.1} parent=0 // loop_footer
    %s13 = sadd.s32 1, %s9
  $region7: #{tpu_custom_call.1} parent=0 // loop_footer_branch
    %8 = sbr.rel target = $region3
  $region8: #{tpu_custom_call.1} parent=0 // loop_exit
    _

</llo_original>
